<compile_context>
chip_gen: v6e
topology: v6e:2x2x1
jax: 0.10.0
libtpu: 0.0.40
codegen_flags: <defaults>
</compile_context>

<pallas_src>
import jax
import jax.numpy as jnp
from jax.experimental import pallas as pl
from jax.experimental.pallas import tpu as pltpu


def _pick_block_rows(batch, n_classes):
    """Rows per batch tile: keep f32 temporaries ~<=4 MiB, multiple of 8."""
    target_f32_bytes = 4 << 20
    rows = target_f32_bytes // max(1, n_classes * 4)
    rows = max(8, min(512, int(rows)))
    rows -= rows % 8
    padded_batch = ((batch + 7) // 8) * 8
    return max(8, min(rows, padded_batch))


def _make_mixup_ce_kernel(n_valid_rows):
    """n_valid_rows is static; rows >= n_valid_rows are zero-padding."""

    def kernel(out_ref, y0_ref, y1_ref, lam_ref, partial_ref):
        i = pl.program_id(0)
        logits = out_ref[...].astype(jnp.float32)            # (TB, C) f32
        tb, c = logits.shape

        # Numerically stable per-row logsumexp.
        m = jnp.max(logits, axis=-1, keepdims=True)           # (TB, 1)
        lse = jnp.log(jnp.sum(jnp.exp(logits - m), axis=-1, keepdims=True)) + m

        # Fused mixed one-hot gather: lam*logit[y0] + (1-lam)*logit[y1] in one
        # compare/select sweep + one cross-lane reduction.
        lam = lam_ref[0, 0]
        class_ids = jax.lax.broadcasted_iota(jnp.int32, (tb, c), 1)
        w = (jnp.where(class_ids == y0_ref[...], lam, 0.0)
             + jnp.where(class_ids == y1_ref[...], 1.0 - lam, 0.0))
        mixed_target_logit = jnp.sum(logits * w, axis=-1, keepdims=True)

        per_row = lse - mixed_target_logit                     # (TB, 1)

        # Mask out rows that are only batch padding.
        row_ids = i * tb + jax.lax.broadcasted_iota(jnp.int32, (tb, 1), 0)
        per_row = jnp.where(row_ids < n_valid_rows, per_row, 0.0)

        # Per-tile partial sum, broadcast into an aligned (8, 128) output block
        # so the batch axis can stay "parallel" (both v7x TCs) with unmasked
        # vector stores.
        psum = jnp.sum(per_row)
        partial_ref[...] = jnp.full(partial_ref.shape, psum, jnp.float32)

    return kernel


def manifold_mixup_loss(out, y0, y1, lam, block_rows=None):
    """out: [B, C] f32/bf16 logits; y0, y1: [B] int labels; lam: scalar."""
    B, C = out.shape
    itemsize = jnp.dtype(out.dtype).itemsize

    TB = block_rows if block_rows is not None else _pick_block_rows(B, C)
    TB = max(8, (int(TB) // 8) * 8)
    B_pad = ((B + TB - 1) // TB) * TB
    num_tiles = B_pad // TB
    pad = B_pad - B

    out_p = jnp.pad(out, ((0, pad), (0, 0)))
    y0_2d = jnp.pad(y0.astype(jnp.int32), (0, pad)).reshape(B_pad, 1)
    y1_2d = jnp.pad(y1.astype(jnp.int32), (0, pad)).reshape(B_pad, 1)
    lam_2d = jnp.asarray(lam, jnp.float32).reshape(1, 1)

    # VMEM budget: 2x double-buffered input blocks + headroom for f32 temps.
    blk_in_bytes = TB * C * itemsize + 2 * TB * 4
    blk_f32_bytes = TB * C * 4
    vmem_limit = 2 * blk_in_bytes + 8 * blk_f32_bytes + (4 << 20)
    vmem_limit = int(min(max(vmem_limit, 32 << 20), 96 << 20))

    cost = pl.CostEstimate(
        flops=6 * B_pad * C,
        transcendentals=B_pad * C,
        bytes_accessed=B_pad * C * itemsize + 2 * B_pad * 4
        + num_tiles * 8 * 128 * 4 + 8,
    )

    partials = pl.pallas_call(
        _make_mixup_ce_kernel(B),
        out_shape=jax.ShapeDtypeStruct((num_tiles * 8, 128), jnp.float32),
        grid=(num_tiles,),
        in_specs=[
            pl.BlockSpec((TB, C), lambda i: (i, 0)),      # logits tile
            pl.BlockSpec((TB, 1), lambda i: (i, 0)),      # y0 tile
            pl.BlockSpec((TB, 1), lambda i: (i, 0)),      # y1 tile
            pl.BlockSpec(memory_space=pltpu.SMEM),        # lam scalar
        ],
        out_specs=pl.BlockSpec((8, 128), lambda i: (i, 0)),
        compiler_params=pltpu.CompilerParams(
            dimension_semantics=("parallel",),
            vmem_limit_bytes=vmem_limit,
        ),
        cost_estimate=cost,
    )(out_p, y0_2d, y1_2d, lam_2d)

    per_tile = partials.reshape(num_tiles, 8, 128)[:, 0, 0]   # one scalar/tile
    return jnp.sum(per_tile) / jnp.float32(B)


def _reference(out, y0, y1, lam):
    logp = jax.nn.log_softmax(out.astype(jnp.float32), axis=-1)
    l0 = -jnp.mean(jnp.take_along_axis(logp, y0[:, None], axis=-1))
    l1 = -jnp.mean(jnp.take_along_axis(logp, y1[:, None], axis=-1))
    return lam * l0 + (1.0 - lam) * l1


if __name__ == "__main__":
    key = jax.random.PRNGKey(0)
    k_out, k_y0, k_y1 = jax.random.split(key, 3)

    # Small shapes; B deliberately not a multiple of the forced tile so the
    # multi-tile + padding-mask path is exercised.
    B, C = 20, 96
    out = jax.random.normal(k_out, (B, C), dtype=jnp.float32)
    y0 = jax.random.randint(k_y0, (B,), 0, C, dtype=jnp.int32)
    y1 = jax.random.randint(k_y1, (B,), 0, C, dtype=jnp.int32)
    lam = jnp.float32(0.3)

    ref = _reference(out, y0, y1, lam)

    # 1) Forced small tile -> 3 grid steps, per-tile partials, row masking.
    loss_tiled = manifold_mixup_loss(out, y0, y1, lam, block_rows=8)
    jax.block_until_ready(loss_tiled)
    assert jnp.allclose(loss_tiled, ref, rtol=1e-5, atol=1e-5), (loss_tiled, ref)

    # 2) Auto-sized tile (single block at this size).
    loss_auto = manifold_mixup_loss(out, y0, y1, lam)
    jax.block_until_ready(loss_auto)
    assert jnp.allclose(loss_auto, ref, rtol=1e-5, atol=1e-5), (loss_auto, ref)

    print("KERNEL_OK")
</pallas_src>

<mosaic_0001>
module attributes {stable_mosaic.version = 11 : i64} {
  func.func @kernel(%arg0: i32, %arg1: memref<8x96xf32, #tpu.memory_space<vmem>>, %arg2: memref<8x1xi32, #tpu.memory_space<vmem>>, %arg3: memref<8x1xi32, #tpu.memory_space<vmem>>, %arg4: memref<1x1xf32, #tpu.memory_space<smem>>, %arg5: memref<8x128xf32, #tpu.memory_space<vmem>>) attributes {dimension_semantics = [#tpu.dimension_semantics<parallel>], iteration_bounds = array<i64: 3>, scalar_prefetch = 0 : i64, scratch_operands = 0 : i64, tpu.core_type = #tpu.core_type<tc>, window_params = [{transform_indices = @transform_0, window_bounds = array<i64: 8, 96>}, {transform_indices = @transform_1, window_bounds = array<i64: 8, 1>}, {transform_indices = @transform_2, window_bounds = array<i64: 8, 1>}, {transform_indices = @transform_3, window_bounds = array<i64: 1, 1>}, {transform_indices = @transform_4, window_bounds = array<i64: 8, 128>}]} {
    %c0 = arith.constant 0 : index
    %c0_0 = arith.constant 0 : index
    %0 = vector.load %arg1[%c0, %c0_0] : memref<8x96xf32, #tpu.memory_space<vmem>>, vector<8x96xf32>
    %cst = arith.constant dense<0xFF800000> : vector<8xf32>
    %1 = vector.multi_reduction <maximumf>, %0, %cst [1] : vector<8x96xf32> to vector<8xf32>
    %2 = vector.shape_cast %1 : vector<8xf32> to vector<8x1xf32>
    %3 = vector.broadcast %2 : vector<8x1xf32> to vector<8x96xf32>
    %4 = arith.subf %0, %3 : vector<8x96xf32>
    %5 = math.exp %4 : vector<8x96xf32>
    %cst_1 = arith.constant dense<0.000000e+00> : vector<8xf32>
    %6 = vector.multi_reduction <add>, %5, %cst_1 [1] : vector<8x96xf32> to vector<8xf32>
    %7 = vector.shape_cast %6 : vector<8xf32> to vector<8x1xf32>
    %8 = math.log %7 : vector<8x1xf32>
    %9 = arith.addf %8, %2 : vector<8x1xf32>
    %c0_2 = arith.constant 0 : index
    %c0_3 = arith.constant 0 : index
    %10 = memref.load %arg4[%c0_2, %c0_3] : memref<1x1xf32, #tpu.memory_space<smem>>
    %11 = tpu.iota {dimensions = array<i32: 1>} : vector<8x96xi32>
    %c0_4 = arith.constant 0 : index
    %c0_5 = arith.constant 0 : index
    %12 = vector.load %arg2[%c0_4, %c0_5] : memref<8x1xi32, #tpu.memory_space<vmem>>, vector<8x1xi32>
    %13 = vector.broadcast %12 : vector<8x1xi32> to vector<8x96xi32>
    %14 = arith.cmpi eq, %11, %13 : vector<8x96xi32>
    %cst_6 = arith.constant 0.000000e+00 : f32
    %15 = vector.broadcast %10 : f32 to vector<8x96xf32>
    %16 = vector.broadcast %cst_6 : f32 to vector<8x96xf32>
    %17 = arith.select %14, %15, %16 : vector<8x96xi1>, vector<8x96xf32>
    %c0_7 = arith.constant 0 : index
    %c0_8 = arith.constant 0 : index
    %18 = vector.load %arg3[%c0_7, %c0_8] : memref<8x1xi32, #tpu.memory_space<vmem>>, vector<8x1xi32>
    %19 = vector.broadcast %18 : vector<8x1xi32> to vector<8x96xi32>
    %20 = arith.cmpi eq, %11, %19 : vector<8x96xi32>
    %cst_9 = arith.constant 1.000000e+00 : f32
    %21 = arith.subf %cst_9, %10 : f32
    %cst_10 = arith.constant 0.000000e+00 : f32
    %22 = vector.broadcast %21 : f32 to vector<8x96xf32>
    %23 = vector.broadcast %cst_10 : f32 to vector<8x96xf32>
    %24 = arith.select %20, %22, %23 : vector<8x96xi1>, vector<8x96xf32>
    %25 = arith.addf %17, %24 : vector<8x96xf32>
    %26 = arith.mulf %0, %25 : vector<8x96xf32>
    %cst_11 = arith.constant dense<0.000000e+00> : vector<8xf32>
    %27 = vector.multi_reduction <add>, %26, %cst_11 [1] : vector<8x96xf32> to vector<8xf32>
    %28 = vector.shape_cast %27 : vector<8xf32> to vector<8x1xf32>
    %29 = arith.subf %9, %28 : vector<8x1xf32>
    %c8_i32 = arith.constant 8 : i32
    %30 = arith.muli %arg0, %c8_i32 : i32
    %31 = tpu.iota {dimensions = array<i32: 0>} : vector<8x1xi32>
    %32 = vector.broadcast %30 : i32 to vector<8x1xi32>
    %33 = arith.addi %32, %31 : vector<8x1xi32>
    %c20_i32 = arith.constant 20 : i32
    %34 = vector.broadcast %c20_i32 : i32 to vector<8x1xi32>
    %35 = arith.cmpi slt, %33, %34 : vector<8x1xi32>
    %cst_12 = arith.constant 0.000000e+00 : f32
    %36 = vector.broadcast %cst_12 : f32 to vector<8x1xf32>
    %37 = arith.select %35, %29, %36 : vector<8x1xi1>, vector<8x1xf32>
    %38 = vector.shape_cast %37 : vector<8x1xf32> to vector<1x8x1xf32>
    %cst_13 = arith.constant dense<0.000000e+00> : vector<1xf32>
    %39 = vector.multi_reduction <add>, %38, %cst_13 [1, 2] : vector<1x8x1xf32> to vector<1xf32>
    %40 = vector.shape_cast %39 : vector<1xf32> to vector<1x1x1xf32>
    %41 = vector.extract %40[0, 0, 0] : f32 from vector<1x1x1xf32>
    %42 = vector.broadcast %41 : f32 to vector<8x128xf32>
    %c0_14 = arith.constant 0 : index
    %c0_15 = arith.constant 0 : index
    %43 = vector.load %arg5[%c0_14, %c0_15] : memref<8x128xf32, #tpu.memory_space<vmem>>, vector<8x128xf32>
    tpu.vector_store %arg5[%c0_14, %c0_15], %42 {strides = array<i32>} : memref<8x128xf32, #tpu.memory_space<vmem>>, vector<8x128xf32>,
    return
  }
  func.func @transform_0(%arg0: i32) -> (i32, i32) {
    %c0_i32 = arith.constant 0 : i32
    %c0_i32_0 = arith.constant 0 : i32
    return %arg0, %c0_i32 : i32, i32
  }
  func.func @transform_1(%arg0: i32) -> (i32, i32) {
    %c0_i32 = arith.constant 0 : i32
    %c0_i32_0 = arith.constant 0 : i32
    return %arg0, %c0_i32 : i32, i32
  }
  func.func @transform_2(%arg0: i32) -> (i32, i32) {
    %c0_i32 = arith.constant 0 : i32
    %c0_i32_0 = arith.constant 0 : i32
    return %arg0, %c0_i32 : i32, i32
  }
  func.func @transform_3(%arg0: i32) -> (i32, i32) {
    %c0_i32 = arith.constant 0 : i32
    %c0_i32_0 = arith.constant 0 : i32
    %c0_i32_1 = arith.constant 0 : i32
    return %c0_i32, %c0_i32_0 : i32, i32
  }
  func.func @transform_4(%arg0: i32) -> (i32, i32) {
    %c0_i32 = arith.constant 0 : i32
    %c0_i32_0 = arith.constant 0 : i32
    return %arg0, %c0_i32 : i32, i32
  }
}

</mosaic_0001>

<llo_original>
// kernel: tpu_custom_call.1
$region0: #{tpu_custom_call.1}
  #allocation0 [shape = 'u32[]', space=smem, size = 0x4, offset = 0x4, fixed_abs, tag = 'smem constant byte address 0x4 - core index']
  #allocation1 [shape = 'u32[144,128]{1,0:T(1,128)}', space=vmem, size = 0x12000, scoped, tag = 'internal scratch']
  #allocation2 [shape = 'f32[1,1]{1,0:T(1,128)S(6)}', space=smem, size = 0x200, scoped, tag = 'scoped memory for tpu_custom_call.1']
  %s0 = inlined_call_operand.vmem [shape: f32[24,96], index: 0, kind: input, shape index: {}]
  %s1 = inlined_call_operand.vmem [shape: s32[24,1], index: 1, kind: input, shape index: {}]
  %s2 = inlined_call_operand.vmem [shape: s32[24,1], index: 2, kind: input, shape index: {}]
  %s3 = inlined_call_operand.<no memory space> [shape: f32[1,1], index: 3, kind: input, shape index: {}]
  %s4 = inlined_call_operand.hbm [shape: f32[24,128], index: 4, kind: output, shape index: {}]
  %s5 = sld [smem:[#allocation0]]
  $region49: #{tpu_custom_call.1} parent=0
    _
  %s7 = ssub.s32 1, %s5
  %s8 = scalar_select 0, %s7, %s5
  %9 = sst [smem:[#allocation2]] %s3
  $region1: #{tpu_custom_call.1} parent=0
    #allocation3 [shape = 'u8[8192]{0}', space=vmem, size = 0x2000, scoped, tag = 'output window, operand 0']
    #allocation4 [shape = 's32[2]{0}', space=sflag, size = 0x8, scoped, tag = 'scoped memory for tpu_custom_call.1']
    %10 = vsyncpa [#allocation4], 0
    %s11 = scalar_lea.sflag [#allocation4], 1
    %12 = vsyncpa %s11, 0
    loop: start=0, step=1, limit=5
    $region2: #{tpu_custom_call.1} parent=1 // loop_pre_header
      _
    $region3: #{tpu_custom_call.1} parent=1 // loop_header
      %s14 = sphi 0, %s18
      %p15 = scmp.ge.s32.totalorder %s14, 5
      %s24 = sphi 0, %s26
      %s27 = sphi 0, %s24
      %s28 = sphi 0, %s27
      %s44 = sphi 0, %s28
      %s50 = sphi 0, %s52
      %s53 = sphi 0, %s50
      %s54 = sphi 0, %s53
      %s70 = sphi 0, %s54
      %s76 = sphi 0, %s78
      %s79 = sphi 0, %s76
      %s80 = sphi 0, %s79
      %s96 = sphi 0, %s80
      %s100 = sphi 0, %s100
      %s102 = sphi 0, %s100
      %s103 = sphi 0, %s102
      %s117 = sphi 0, %s103
      %s123 = sphi 0, %s125
      %s126 = sphi 0, %s123
      %s127 = sphi 0, %s126
      %s143 = sphi 0, %s127
    $region4: #{tpu_custom_call.1} parent=1 // loop_header_branch
      %17 = sbr.rel (%p15) target = $region8
    $region5: #{tpu_custom_call.1} parent=1 // loop_body
      %s19 = ssub.s32 %s14, 1
      %s20 = ssub.s32 %s14, 2
      %s21 = sadd.s32 %s14, 1
      %s22 = ssub.s32 %s14, %s21
      %p23 = scmp.eq.s32.totalorder %s22, 0
      %s25 = sadd.s32 %s24, 1
      %s26 = scalar_select %p23, %s24, %s25
      %p29 = pneg %p23
      %p30 = scmp.eq.s32.totalorder %s14, 2
      %p31 = por %p29, %p30
      %p32 = scmp.ne.s32.totalorder %s24, %s27
      %p33 = scmp.eq.s32.totalorder %s14, 0
      %p34 = por %p32, %p33
      %p35 = scmp.ne.s32.totalorder %s24, %s27
      %p36 = scmp.eq.s32.totalorder %s19, 2
      %p37 = por %p35, %p36
      %p38 = scmp.ne.s32.totalorder %s27, %s28
      %p39 = scmp.eq.s32.totalorder %s19, 0
      %p40 = por %p38, %p39
      %p41 = scmp.ne.s32.totalorder %s27, %s28
      %p42 = scmp.eq.s32.totalorder %s20, 2
      %p43 = por %p41, %p42
      %p45 = scmp.ne.s32.totalorder %s28, %s44
      %p46 = scmp.eq.s32.totalorder %s20, 0
      %p47 = por %p45, %p46
      %s48 = ssub.s32 %s14, %s21
      %p49 = scmp.eq.s32.totalorder %s48, 0
      %s51 = sadd.s32 %s50, 1
      %s52 = scalar_select %p49, %s50, %s51
      %p55 = pneg %p49
      %p56 = scmp.eq.s32.totalorder %s14, 2
      %p57 = por %p55, %p56
      %p58 = scmp.ne.s32.totalorder %s50, %s53
      %p59 = scmp.eq.s32.totalorder %s14, 0
      %p60 = por %p58, %p59
      %p61 = scmp.ne.s32.totalorder %s50, %s53
      %p62 = scmp.eq.s32.totalorder %s19, 2
      %p63 = por %p61, %p62
      %p64 = scmp.ne.s32.totalorder %s53, %s54
      %p65 = scmp.eq.s32.totalorder %s19, 0
      %p66 = por %p64, %p65
      %p67 = scmp.ne.s32.totalorder %s53, %s54
      %p68 = scmp.eq.s32.totalorder %s20, 2
      %p69 = por %p67, %p68
      %p71 = scmp.ne.s32.totalorder %s54, %s70
      %p72 = scmp.eq.s32.totalorder %s20, 0
      %p73 = por %p71, %p72
      %s74 = ssub.s32 %s14, %s21
      %p75 = scmp.eq.s32.totalorder %s74, 0
      %s77 = sadd.s32 %s76, 1
      %s78 = scalar_select %p75, %s76, %s77
      %p81 = pneg %p75
      %p82 = scmp.eq.s32.totalorder %s14, 2
      %p83 = por %p81, %p82
      %p84 = scmp.ne.s32.totalorder %s76, %s79
      %p85 = scmp.eq.s32.totalorder %s14, 0
      %p86 = por %p84, %p85
      %p87 = scmp.ne.s32.totalorder %s76, %s79
      %p88 = scmp.eq.s32.totalorder %s19, 2
      %p89 = por %p87, %p88
      %p90 = scmp.ne.s32.totalorder %s79, %s80
      %p91 = scmp.eq.s32.totalorder %s19, 0
      %p92 = por %p90, %p91
      %p93 = scmp.ne.s32.totalorder %s79, %s80
      %p94 = scmp.eq.s32.totalorder %s20, 2
      %p95 = por %p93, %p94
      %p97 = scmp.ne.s32.totalorder %s80, %s96
      %p98 = scmp.eq.s32.totalorder %s20, 0
      %p99 = por %p97, %p98
      %s101 = sadd.s32 %s100, 1
      %p104 = scmp.eq.s32.totalorder %s14, 2
      %p105 = scmp.ne.s32.totalorder %s100, %s102
      %p106 = scmp.eq.s32.totalorder %s14, 0
      %p107 = por %p105, %p106
      %p108 = scmp.ne.s32.totalorder %s100, %s102
      %p109 = scmp.eq.s32.totalorder %s19, 2
      %p110 = por %p108, %p109
      %p111 = scmp.ne.s32.totalorder %s102, %s103
      %p112 = scmp.eq.s32.totalorder %s19, 0
      %p113 = por %p111, %p112
      %p114 = scmp.ne.s32.totalorder %s102, %s103
      %p115 = scmp.eq.s32.totalorder %s20, 2
      %p116 = por %p114, %p115
      %p118 = scmp.ne.s32.totalorder %s103, %s117
      %p119 = scmp.eq.s32.totalorder %s20, 0
      %p120 = por %p118, %p119
      %s121 = ssub.s32 %s14, %s21
      %p122 = scmp.eq.s32.totalorder %s121, 0
      %s124 = sadd.s32 %s123, 1
      %s125 = scalar_select %p122, %s123, %s124
      %p128 = pneg %p122
      %p129 = scmp.eq.s32.totalorder %s14, 2
      %p130 = por %p128, %p129
      %p131 = scmp.ne.s32.totalorder %s123, %s126
      %p132 = scmp.eq.s32.totalorder %s14, 0
      %p133 = por %p131, %p132
      %p134 = scmp.ne.s32.totalorder %s123, %s126
      %p135 = scmp.eq.s32.totalorder %s19, 2
      %p136 = por %p134, %p135
      %p137 = scmp.ne.s32.totalorder %s126, %s127
      %p138 = scmp.eq.s32.totalorder %s19, 0
      %p139 = por %p137, %p138
      %p140 = scmp.ne.s32.totalorder %s126, %s127
      %p141 = scmp.eq.s32.totalorder %s20, 2
      %p142 = por %p140, %p141
      %p144 = scmp.ne.s32.totalorder %s127, %s143
      %p145 = scmp.eq.s32.totalorder %s20, 0
      %p146 = por %p144, %p145
      %p147 = scmp.le.s32.totalorder 1, %s14
      %p148 = scmp.lt.s32.totalorder %s14, 4
      %p149 = pnand %p147, %p148
      %p150 = pneg %p149
      // Predicated region
      $region9: #{tpu_custom_call.1} parent=5 // pred_check
        _
      $region10: #{tpu_custom_call.1} parent=5 // pred_check_branch
        %152 = sbr.rel (%p149) target = $region12
      $region11: #{tpu_custom_call.1} parent=5 // pred_region
        %s153 = ssub.s32 %s14, 1
        // Predicated region
        $region13: #{tpu_custom_call.1} parent=11 // pred_check
          %p154 = pneg %p113
        $region14: #{tpu_custom_call.1} parent=11 // pred_check_branch
          %156 = sbr.rel (%p154) target = $region16
        $region15: #{tpu_custom_call.1} parent=11 // pred_region
          _
        $region16: #{tpu_custom_call.1} parent=11 // pred_fallthru
          _
      $region12: #{tpu_custom_call.1} parent=5 // pred_fallthru
        _
      %p157 = scmp.lt.s32.totalorder %s14, 3
      // Predicated region
      $region17: #{tpu_custom_call.1} parent=5 // pred_check
        %p158 = pneg %p157
      $region18: #{tpu_custom_call.1} parent=5 // pred_check_branch
        %160 = sbr.rel (%p158) target = $region20
      $region19: #{tpu_custom_call.1} parent=5 // pred_region
        // Predicated region
        $region21: #{tpu_custom_call.1} parent=19 // pred_check
          %p161 = pneg %p34
        $region22: #{tpu_custom_call.1} parent=19 // pred_check_branch
          %163 = sbr.rel (%p161) target = $region24
        $region23: #{tpu_custom_call.1} parent=19 // pred_region
          %p164 = scmp.lt.s32.totalorder %s14, 2
          %s165 = scalar_select %p164, %s14, 2
          %s166 = smul.addr %s165, 8
          %s167 = scalar_lea.vmem %s0, %s166
        $region24: #{tpu_custom_call.1} parent=19 // pred_fallthru
          _
        // Predicated region
        $region25: #{tpu_custom_call.1} parent=19 // pred_check
          %p168 = pneg %p60
        $region26: #{tpu_custom_call.1} parent=19 // pred_check_branch
          %170 = sbr.rel (%p168) target = $region28
        $region27: #{tpu_custom_call.1} parent=19 // pred_region
          %p171 = scmp.lt.s32.totalorder %s14, 2
          %s172 = scalar_select %p171, %s14, 2
          %s173 = smul.addr %s172, 8
          %s174 = scalar_lea.vmem %s1, %s173
        $region28: #{tpu_custom_call.1} parent=19 // pred_fallthru
          _
        // Predicated region
        $region29: #{tpu_custom_call.1} parent=19 // pred_check
          %p175 = pneg %p86
        $region30: #{tpu_custom_call.1} parent=19 // pred_check_branch
          %177 = sbr.rel (%p175) target = $region32
        $region31: #{tpu_custom_call.1} parent=19 // pred_region
          %p178 = scmp.lt.s32.totalorder %s14, 2
          %s179 = scalar_select %p178, %s14, 2
          %s180 = smul.addr %s179, 8
          %s181 = scalar_lea.vmem %s2, %s180
        $region32: #{tpu_custom_call.1} parent=19 // pred_fallthru
          _
      $region20: #{tpu_custom_call.1} parent=5 // pred_fallthru
        _
      %p182 = scmp.le.s32.totalorder 1, %s14
      %p183 = scmp.lt.s32.totalorder %s14, 4
      %p184 = pnand %p182, %p183
      %p185 = pneg %p184
      // Predicated region
      $region33: #{tpu_custom_call.1} parent=5 // pred_check
        _
      $region34: #{tpu_custom_call.1} parent=5 // pred_check_branch
        %187 = sbr.rel (%p184) target = $region36
      $region35: #{tpu_custom_call.1} parent=5 // pred_region
        %s188 = ssub.s32 %s14, 1
        %p189 = scmp.lt.s32.totalorder %s19, 2
        %s190 = scalar_select %p189, %s19, 2
        %s191 = smul.addr %s190, 8
        %s192 = scalar_lea.vmem %s0, %s191
        %p193 = pneg %p40
        %p194 = pneg %p37
        %p195 = scmp.lt.s32.totalorder %s19, 2
        %s196 = scalar_select %p195, %s19, 2
        %s197 = smul.addr %s196, 8
        %s198 = scalar_lea.vmem %s1, %s197
        %p199 = pneg %p66
        %p200 = pneg %p63
        %p201 = scmp.lt.s32.totalorder %s19, 2
        %s202 = scalar_select %p201, %s19, 2
        %s203 = smul.addr %s202, 8
        %s204 = scalar_lea.vmem %s2, %s203
        %p205 = pneg %p92
        %p206 = pneg %p89
        %p207 = pneg %p113
        %p208 = pneg %p110
        %p209 = pneg %p139
        %p210 = pneg %p136
        %s211 = sand.u32 %s126, 1
        %s212 = scalar_lea.sflag [#allocation4], %s211
        %s213 = sand.u32 %s126, 1
        %s214 = smul.addr %s213, 8
        %s215 = scalar_lea.vmem [#allocation3], %s214
        %p216 = scmp.lt.s32.totalorder %s19, 2
        %s217 = scalar_select %p216, %s19, 2
        %s218 = smul.addr %s217, 8
        %s219 = scalar_lea.vmem %s0, %s218
        %p220 = scmp.lt.s32.totalorder %s19, 2
        %s221 = scalar_select %p220, %s19, 2
        %s222 = smul.addr %s221, 8
        %s223 = scalar_lea.vmem %s1, %s222
        %p224 = scmp.lt.s32.totalorder %s19, 2
        %s225 = scalar_select %p224, %s19, 2
        %s226 = smul.addr %s225, 8
        %s227 = scalar_lea.vmem %s2, %s226
        %v228 = vld [vmem:[%s219] sm:$0xff]
        %vm229 = vcmask 785408
        %v230 = vsel %vm229, %v228, -inf
        %231 = vmax.xlane.f32.xlu0 %v230
        %v232 = vpop.xlane.xlu0 %231
        %v233 = vsub.f32 %v228, %v232
        %v234 = vmul.f32 %v233, 1.442695
        %v235 = vpow.pop %v234
        %v236 = vsel %vm229, %v235, 0.0
        %237 = vadd.xlane.f32.xlu0 %v236
        %v238 = vpop.xlane.xlu0 %237
        %v239 = vlog2.pop %v238
        %v240 = vmul.f32 %v239, 0.6931472
        %v241 = vadd.f32 %v240, %v232
        %s242 = sld [smem:[#allocation2]]
        %v243 = vlaneseq
        %v244 = vand.u32 %v243, 127
        %v245 = vld [vmem:[%s223] sm:$0xff]
        %246 = vset.pattern.permute.xlu0 0
        %247 = vperm.xlu0 %246, %v245
        %v248 = vpop.permute.xlu0 %247
        %vm249 = vcmp.eq.s32.totalorder %v244, %v248
        %v250 = vstv %s242
        %v251 = vsel %vm249, %v250, 0.0
        %v252 = vld [vmem:[%s227] sm:$0xff]
        %253 = vset.pattern.permute.xlu0 0
        %254 = vperm.xlu0 %253, %v252
        %v255 = vpop.permute.xlu0 %254
        %vm256 = vcmp.eq.s32.totalorder %v244, %v255
        %s257 = ssub.f32 1.0, %s242
        %v258 = vstv %s257
        %v259 = vsel %vm256, %v258, 0.0
        %v260 = vadd.f32 %v251, %v259
        %v261 = vmul.f32 %v228, %v260
        %v262 = vsel %vm229, %v261, 0.0
        %263 = vadd.xlane.f32.xlu0 %v262
        %v264 = vpop.xlane.xlu0 %263
        %v265 = vsub.f32 %v241, %v264
        %s266 = smul.u32 %s19, 8
        %v267 = vlaneseq
        %v268 = vshrl.u32 %v267, 7
        %v269 = vstv %s266
        %v270 = vadd.s32 %v269, %v268
        %vm271 = vcmp.lt.s32.totalorder %v270, 20
        %v272 = vsel %vm271, %v265, 0.0
        %vm273 = vcmask 7168
        %v274 = vsel %vm273, %v272, 0.0
        %275 = vadd.xlane.f32.xlu0 %v274
        %v276 = vpop.xlane.xlu0 %275
        %v277 = vrot.slane %v276, 4
        %v278 = vadd.f32 %v276, %v277
        %v279 = vrot.slane %v278, 2
        %v280 = vadd.f32 %v278, %v279
        %v281 = vrot.slane %v280, 1
        %v282 = vadd.f32 %v280, %v281
        %s283 = vtos %v282
        %v284 = vstv %s283
        %285 = vst [vmem:[%s215] sm:$0xff] %v284
        %s286 = sand.u32 %s126, 1
        %s287 = scalar_lea.sflag [#allocation4], %s286
        %s288 = sand.u32 %s126, 1
        %s289 = smul.addr %s288, 8
        %s290 = scalar_lea.vmem [#allocation3], %s289
        // Predicated region
        $region37: #{tpu_custom_call.1} parent=35 // pred_check
          %p291 = pneg %p136
        $region38: #{tpu_custom_call.1} parent=35 // pred_check_branch
          %293 = sbr.rel (%p291) target = $region40
        $region39: #{tpu_custom_call.1} parent=35 // pred_region
          %s295 = ssub.s32 128, 128
          %296 = vsyncadd %s287, %s295
          %s297 = smul.addr %s19, 128
          %s298 = scalar_lea.hbm %s4, %s297
          %s300 = sshll.u32 %s290, 4
          %s301 = int_to_ptr.vmem [resolvable:$true] %s300
          %303 = dma.vmem_to_hbm [thread:$0]  %s301, 128, %s298, %s287
        $region40: #{tpu_custom_call.1} parent=35 // pred_fallthru
          _
      $region36: #{tpu_custom_call.1} parent=5 // pred_fallthru
        _
      %p304 = scmp.le.s32.totalorder 2, %s14
      // Predicated region
      $region41: #{tpu_custom_call.1} parent=5 // pred_check
        %p305 = pneg %p304
      $region42: #{tpu_custom_call.1} parent=5 // pred_check_branch
        %307 = sbr.rel (%p305) target = $region44
      $region43: #{tpu_custom_call.1} parent=5 // pred_region
        %s308 = ssub.s32 %s14, 2
        // Predicated region
        $region45: #{tpu_custom_call.1} parent=43 // pred_check
          %p309 = pneg %p142
        $region46: #{tpu_custom_call.1} parent=43 // pred_check_branch
          %311 = sbr.rel (%p309) target = $region48
        $region47: #{tpu_custom_call.1} parent=43 // pred_region
          %s312 = sand.u32 %s127, 1
          %s313 = scalar_lea.sflag [#allocation4], %s312
          %s314 = sand.u32 %s127, 1
          %s315 = smul.addr %s314, 8
          %s316 = scalar_lea.vmem [#allocation3], %s315
          %317 = dma.done %s313, 128
        $region48: #{tpu_custom_call.1} parent=43 // pred_fallthru
          _
      $region44: #{tpu_custom_call.1} parent=5 // pred_fallthru
        _
    $region6: #{tpu_custom_call.1} parent=1 // loop_footer
      %s18 = sadd.s32 1, %s14
    $region7: #{tpu_custom_call.1} parent=1 // loop_footer_branch
      %13 = sbr.rel target = $region3
    $region8: #{tpu_custom_call.1} parent=1 // loop_exit
      _
    %318 = vsyncpa [#allocation4], 1
    %s319 = scalar_lea.sflag [#allocation4], 1
    %320 = vsyncpa %s319, 1

</llo_original>
